<compile_context>
chip_gen: v7x
topology: tpu7x:2x2x1
jax: 0.10.0
libtpu: 0.0.40
codegen_flags: <defaults>
</compile_context>

<pallas_src>
import functools

import jax
import jax.numpy as jnp
from jax.experimental import pallas as pl
from jax.experimental.pallas import tpu as pltpu

LANES = 128
SUBLANES = 8


def _tpu_flags():
    """Returns (num_splits, approx_reciprocal) tuned per TPU generation."""
    try:
        kind = jax.devices()[0].device_kind.lower()
    except Exception:
        kind = ""
    is_v7 = ("v7" in kind) or ("7x" in kind)
    # v5e / v6e: one TensorCore -> leading split is pure overhead.
    # v7x: 2 TC/chip -> split the reduction; approx vrcp frees VALU headroom.
    return (2 if is_v7 else 1), is_v7


def _reg_pos_kernel(pred_ref, lab0_ref, lab1_ref, out_ref,
                    acc_loss_ref, acc_mask_ref,
                    *, steps, tile_r, hw_rows, approx, fuse_divide,
                    needs_mask, vreg_acc):
    c = pl.program_id(0)          # core split ("parallel")
    n = pl.program_id(1)          # batch   ("arbitrary")
    i = pl.program_id(2)          # row-block within batch ("arbitrary")

    @pl.when(jnp.logical_and(n == 0, i == 0))
    def _init():
        acc_loss_ref[...] = jnp.zeros_like(acc_loss_ref)
        acc_mask_ref[...] = jnp.zeros_like(acc_mask_ref)

    pred = pred_ref[...].astype(jnp.float32)      # (tile_r, 128)
    lab0 = lab0_ref[...].astype(jnp.float32)
    lab1 = lab1_ref[...].astype(jnp.float32)

    # d = |pred - lab0| / (lab0 + eps)  (one reciprocal, EUP when approx)
    r = pl.reciprocal(lab0 + jnp.float32(1e-10), approx=approx)
    d = jnp.abs(pred - lab0) * r
    sl1 = jnp.where(d < jnp.float32(1.0),
                    jnp.float32(0.5) * d * d,
                    d - jnp.float32(0.5))
    contrib = lab1 * sl1

    if needs_mask:
        # Logical (unclamped) row index within this batch's (hw_rows, 128) slab.
        row0 = (c * steps + i) * tile_r
        rows = jax.lax.broadcasted_iota(jnp.int32, (tile_r, LANES), 0) + row0
        valid = rows < hw_rows
        contrib = jnp.where(valid, contrib, jnp.float32(0.0))
        lab1 = jnp.where(valid, lab1, jnp.float32(0.0))

    if vreg_acc:
        # Per-step VALU tree-add into a full (8,128) vreg accumulator.
        acc_loss_ref[...] += jnp.sum(
            contrib.reshape(tile_r // SUBLANES, SUBLANES, LANES), axis=0)
        acc_mask_ref[...] += jnp.sum(
            lab1.reshape(tile_r // SUBLANES, SUBLANES, LANES), axis=0)
    else:
        # Tiny tiles (tile_r not a multiple of 8): keep a 1-sublane partial.
        acc_loss_ref[0:1, :] += jnp.sum(contrib, axis=0, keepdims=True)
        acc_mask_ref[0:1, :] += jnp.sum(lab1, axis=0, keepdims=True)

    @pl.when(jnp.logical_and(n == pl.num_programs(1) - 1,
                             i == pl.num_programs(2) - 1))
    def _finalize():
        loss_sum = jnp.sum(acc_loss_ref[...])
        mask_sum = jnp.sum(acc_mask_ref[...])
        if fuse_divide:
            out_ref[0, 0] = loss_sum / jnp.maximum(jnp.float32(1.0), mask_sum)
        else:
            out_ref[0, 0] = loss_sum
            out_ref[0, 1] = mask_sum


def reg_pos_loss(h_pred, h_label, *, tile_rows=2048, num_splits=None, approx=None):
    """h_pred: (N, Cp, H, W); h_label: (N, Cl>=2, H, W). Returns scalar f32 loss."""
    N, Cp, H, W = h_pred.shape
    _, Cl, _, _ = h_label.shape
    hw = H * W
    total = N * hw

    ns_auto, ap_auto = _tpu_flags()
    if num_splits is None:
        num_splits = ns_auto
    if approx is None:
        approx = ap_auto

    if hw % LANES == 0:
        # Fast path: pure metadata reshapes, channels selected by index_map rows.
        hw_rows = hw // LANES
        pred3 = h_pred.reshape(N * Cp, hw_rows, LANES)
        lab3 = h_label.reshape(N * Cl, hw_rows, LANES)
        lab_a, lab_b = lab3, lab3
        pred_row = lambda n: n * Cp           # channel 0 of h_pred
        lab0_row = lambda n: n * Cl           # channel 0 of h_label
        lab1_row = lambda n: n * Cl + 1       # channel 1 of h_label
        n_batches = N
    else:
        # TODO(synk): slow fallback (one extra copy) when H*W % 128 != 0.
        def flat_pad(x):
            x = x.reshape(-1)
            pad = (-x.size) % LANES
            if pad:
                x = jnp.pad(x, (0, pad))
            return x.reshape(1, x.size // LANES, LANES)
        pred3 = flat_pad(h_pred[:, 0])
        lab_a = flat_pad(h_label[:, 0])
        lab_b = flat_pad(h_label[:, 1])
        hw_rows = pred3.shape[1]
        pred_row = lab0_row = lab1_row = lambda n: 0
        n_batches = 1

    # Tile selection: either the full middle dim (always legal) or a multiple of 8.
    tile_rows = max(SUBLANES, (tile_rows // SUBLANES) * SUBLANES)
    tile_r = tile_rows if hw_rows > tile_rows else hw_rows
    total_blocks = pl.cdiv(hw_rows, tile_r)
    steps = pl.cdiv(total_blocks, num_splits)
    max_blk = total_blocks - 1
    needs_mask = (num_splits * steps * tile_r) > hw_rows
    vreg_acc = (tile_r % SUBLANES == 0)
    fuse_divide = (num_splits == 1)

    def make_map(row_fn):
        def index_map(c, n, i):
            blk = jnp.minimum(c * steps + i, max_blk)  # clamp fully-OOB split blocks
            return (row_fn(n), blk, 0)
        return index_map

    in_spec = lambda row_fn: pl.BlockSpec((None, tile_r, LANES), make_map(row_fn))

    out_cols = 1 if fuse_divide else 2
    out_shape = jax.ShapeDtypeStruct((num_splits, out_cols), jnp.float32)
    out_spec = pl.BlockSpec((1, out_cols), lambda c, n, i: (c, 0),
                            memory_space=pltpu.SMEM)

    itemsize = max(jnp.dtype(h_pred.dtype).itemsize, jnp.dtype(h_label.dtype).itemsize)
    cost = pl.CostEstimate(flops=8 * total,
                           transcendentals=total,
                           bytes_accessed=3 * total * itemsize)

    kernel = functools.partial(
        _reg_pos_kernel, steps=steps, tile_r=tile_r, hw_rows=hw_rows,
        approx=approx, fuse_divide=fuse_divide, needs_mask=needs_mask,
        vreg_acc=vreg_acc)

    partials = pl.pallas_call(
        kernel,
        out_shape=out_shape,
        grid=(num_splits, n_batches, steps),
        in_specs=[in_spec(pred_row), in_spec(lab0_row), in_spec(lab1_row)],
        out_specs=out_spec,
        scratch_shapes=[pltpu.VMEM((SUBLANES, LANES), jnp.float32),
                        pltpu.VMEM((SUBLANES, LANES), jnp.float32)],
        compiler_params=pltpu.CompilerParams(
            dimension_semantics=("parallel", "arbitrary", "arbitrary")),
        cost_estimate=cost,
    )(pred3, lab_a, lab_b)

    if fuse_divide:
        return partials[0, 0]
    loss_sum = jnp.sum(partials[:, 0])
    mask_sum = jnp.sum(partials[:, 1])
    return loss_sum / jnp.maximum(jnp.float32(1.0), mask_sum)


def reg_pos_ref(h_pred, h_label):
    """Pure-JAX reference of the PyTorch forward."""
    p = h_pred[:, 0, :, :]
    l0 = h_label[:, 0, :, :]
    l1 = h_label[:, 1, :, :]
    x = p / (l0 + 1e-10)
    y = l0 / (l0 + 1e-10)
    d = jnp.abs(x - y)
    sl1 = jnp.where(d < 1.0, 0.5 * d * d, d - 0.5)
    return jnp.sum(l1 * sl1) / jnp.maximum(1.0, jnp.sum(l1))


if __name__ == "__main__":
    key = jax.random.PRNGKey(0)
    k1, k2, k3 = jax.random.split(key, 3)

    N, H, W = 2, 16, 16
    # h_pred: predicted height map (1 channel used)
    h_pred = jax.random.uniform(k1, (N, 1, H, W), jnp.float32, 0.1, 2.0)
    # h_label channel 0: target heights; channel 1: binary positive mask
    heights = jax.random.uniform(k2, (N, 1, H, W), jnp.float32, 0.1, 2.0)
    mask = (jax.random.uniform(k3, (N, 1, H, W)) > 0.7).astype(jnp.float32)
    h_label = jnp.concatenate([heights, mask], axis=1)  # (N, 2, H, W)

    out = jax.block_until_ready(reg_pos_loss(h_pred, h_label))
    ref = jax.block_until_ready(reg_pos_ref(h_pred, h_label))

    _, approx_used = _tpu_flags()
    rtol = 5e-3 if approx_used else 1e-5   # approx vrcp on v7x adds ~1e-3 rel err in d
    assert jnp.allclose(out, ref, rtol=rtol, atol=1e-6), (out, ref)
    print("KERNEL_OK")
</pallas_src>

<mosaic_0001>
module attributes {stable_mosaic.version = 11 : i64} {
  func.func @_reg_pos_kernel(%arg0: i32, %arg1: i32, %arg2: i32, %arg3: memref<1x2x128xf32, #tpu.memory_space<vmem>>, %arg4: memref<1x2x128xf32, #tpu.memory_space<vmem>>, %arg5: memref<1x2x128xf32, #tpu.memory_space<vmem>>, %arg6: memref<1x1xf32, #tpu.memory_space<smem>>, %arg7: memref<8x128xf32, #tpu.memory_space<vmem>>, %arg8: memref<8x128xf32, #tpu.memory_space<vmem>>) attributes {dimension_semantics = [#tpu.dimension_semantics<parallel>, #tpu.dimension_semantics<arbitrary>, #tpu.dimension_semantics<arbitrary>], iteration_bounds = array<i64: 1, 2, 1>, scalar_prefetch = 0 : i64, scratch_operands = 2 : i64, tpu.core_type = #tpu.core_type<tc>, window_params = [{transform_indices = @transform_0, window_bounds = array<i64: 1, 2, 128>}, {transform_indices = @transform_1, window_bounds = array<i64: 1, 2, 128>}, {transform_indices = @transform_2, window_bounds = array<i64: 1, 2, 128>}, {transform_indices = @transform_3, window_bounds = array<i64: 1, 1>}]} {
    %c0_i32 = arith.constant 0 : i32
    %0 = arith.cmpi eq, %arg1, %c0_i32 : i32
    %c0_i32_0 = arith.constant 0 : i32
    %1 = arith.cmpi eq, %arg2, %c0_i32_0 : i32
    %2 = arith.andi %0, %1 : i1
    %3 = arith.extui %2 : i1 to i32
    %c0_i32_1 = arith.constant 0 : i32
    %4 = arith.cmpi ne, %3, %c0_i32_1 : i32
    scf.if %4 {
      %cst_25 = arith.constant 0.000000e+00 : f32
      %41 = vector.broadcast %cst_25 : f32 to vector<8x128xf32>
      %c0_26 = arith.constant 0 : index
      %c0_27 = arith.constant 0 : index
      %42 = vector.load %arg7[%c0_26, %c0_27] : memref<8x128xf32, #tpu.memory_space<vmem>>, vector<8x128xf32>
      tpu.vector_store %arg7[%c0_26, %c0_27], %41 {strides = array<i32>} : memref<8x128xf32, #tpu.memory_space<vmem>>, vector<8x128xf32>,
      %cst_28 = arith.constant 0.000000e+00 : f32
      %43 = vector.broadcast %cst_28 : f32 to vector<8x128xf32>
      %c0_29 = arith.constant 0 : index
      %c0_30 = arith.constant 0 : index
      %44 = vector.load %arg8[%c0_29, %c0_30] : memref<8x128xf32, #tpu.memory_space<vmem>>, vector<8x128xf32>
      tpu.vector_store %arg8[%c0_29, %c0_30], %43 {strides = array<i32>} : memref<8x128xf32, #tpu.memory_space<vmem>>, vector<8x128xf32>,
    } else {
    }
    %c0 = arith.constant 0 : index
    %c0_2 = arith.constant 0 : index
    %c0_3 = arith.constant 0 : index
    %5 = vector.load %arg3[%c0, %c0_2, %c0_3] : memref<1x2x128xf32, #tpu.memory_space<vmem>>, vector<1x2x128xf32>
    %6 = vector.shape_cast %5 : vector<1x2x128xf32> to vector<2x128xf32>
    %c0_4 = arith.constant 0 : index
    %c0_5 = arith.constant 0 : index
    %c0_6 = arith.constant 0 : index
    %7 = vector.load %arg4[%c0_4, %c0_5, %c0_6] : memref<1x2x128xf32, #tpu.memory_space<vmem>>, vector<1x2x128xf32>
    %8 = vector.shape_cast %7 : vector<1x2x128xf32> to vector<2x128xf32>
    %c0_7 = arith.constant 0 : index
    %c0_8 = arith.constant 0 : index
    %c0_9 = arith.constant 0 : index
    %9 = vector.load %arg5[%c0_7, %c0_8, %c0_9] : memref<1x2x128xf32, #tpu.memory_space<vmem>>, vector<1x2x128xf32>
    %10 = vector.shape_cast %9 : vector<1x2x128xf32> to vector<2x128xf32>
    %cst = arith.constant 1.000000e-10 : f32
    %11 = vector.broadcast %cst : f32 to vector<2x128xf32>
    %12 = arith.addf %8, %11 : vector<2x128xf32>
    %13 = tpu.reciprocal %12 : vector<2x128xf32> -> vector<2x128xf32>
    %14 = arith.subf %6, %8 : vector<2x128xf32>
    %15 = math.absf %14 : vector<2x128xf32>
    %16 = arith.mulf %15, %13 : vector<2x128xf32>
    %cst_10 = arith.constant 1.000000e+00 : f32
    %17 = vector.broadcast %cst_10 : f32 to vector<2x128xf32>
    %18 = arith.cmpf olt, %16, %17 : vector<2x128xf32>
    %cst_11 = arith.constant 5.000000e-01 : f32
    %19 = vector.broadcast %cst_11 : f32 to vector<2x128xf32>
    %20 = arith.mulf %19, %16 : vector<2x128xf32>
    %21 = arith.mulf %20, %16 : vector<2x128xf32>
    %cst_12 = arith.constant 5.000000e-01 : f32
    %22 = vector.broadcast %cst_12 : f32 to vector<2x128xf32>
    %23 = arith.subf %16, %22 : vector<2x128xf32>
    %24 = arith.select %18, %21, %23 : vector<2x128xi1>, vector<2x128xf32>
    %25 = arith.mulf %10, %24 : vector<2x128xf32>
    %c0_13 = arith.constant 0 : index
    %c0_14 = arith.constant 0 : index
    %26 = vector.load %arg7[%c0_13, %c0_14] : memref<8x128xf32, #tpu.memory_space<vmem>>, vector<1x128xf32>
    %cst_15 = arith.constant dense<0.000000e+00> : vector<128xf32>
    %27 = vector.multi_reduction <add>, %25, %cst_15 [0] : vector<2x128xf32> to vector<128xf32>
    %28 = vector.shape_cast %27 : vector<128xf32> to vector<1x128xf32>
    %29 = arith.addf %26, %28 : vector<1x128xf32>
    %c0_16 = arith.constant 0 : index
    %c0_17 = arith.constant 0 : index
    %30 = vector.load %arg7[%c0_16, %c0_17] : memref<8x128xf32, #tpu.memory_space<vmem>>, vector<1x128xf32>
    tpu.vector_store %arg7[%c0_16, %c0_17], %29 {strides = array<i32>} : memref<8x128xf32, #tpu.memory_space<vmem>>, vector<1x128xf32>,
    %c0_18 = arith.constant 0 : index
    %c0_19 = arith.constant 0 : index
    %31 = vector.load %arg8[%c0_18, %c0_19] : memref<8x128xf32, #tpu.memory_space<vmem>>, vector<1x128xf32>
    %cst_20 = arith.constant dense<0.000000e+00> : vector<128xf32>
    %32 = vector.multi_reduction <add>, %10, %cst_20 [0] : vector<2x128xf32> to vector<128xf32>
    %33 = vector.shape_cast %32 : vector<128xf32> to vector<1x128xf32>
    %34 = arith.addf %31, %33 : vector<1x128xf32>
    %c0_21 = arith.constant 0 : index
    %c0_22 = arith.constant 0 : index
    %35 = vector.load %arg8[%c0_21, %c0_22] : memref<8x128xf32, #tpu.memory_space<vmem>>, vector<1x128xf32>
    tpu.vector_store %arg8[%c0_21, %c0_22], %34 {strides = array<i32>} : memref<8x128xf32, #tpu.memory_space<vmem>>, vector<1x128xf32>,
    %c1_i32 = arith.constant 1 : i32
    %36 = arith.cmpi eq, %arg1, %c1_i32 : i32
    %c0_i32_23 = arith.constant 0 : i32
    %37 = arith.cmpi eq, %arg2, %c0_i32_23 : i32
    %38 = arith.andi %36, %37 : i1
    %39 = arith.extui %38 : i1 to i32
    %c0_i32_24 = arith.constant 0 : i32
    %40 = arith.cmpi ne, %39, %c0_i32_24 : i32
    scf.if %40 {
      %c0_25 = arith.constant 0 : index
      %c0_26 = arith.constant 0 : index
      %41 = vector.load %arg7[%c0_25, %c0_26] : memref<8x128xf32, #tpu.memory_space<vmem>>, vector<8x128xf32>
      %42 = vector.shape_cast %41 : vector<8x128xf32> to vector<1x8x128xf32>
      %cst_27 = arith.constant dense<0.000000e+00> : vector<1xf32>
      %43 = vector.multi_reduction <add>, %42, %cst_27 [1, 2] : vector<1x8x128xf32> to vector<1xf32>
      %44 = vector.shape_cast %43 : vector<1xf32> to vector<1x1x1xf32>
      %45 = vector.extract %44[0, 0, 0] : f32 from vector<1x1x1xf32>
      %c0_28 = arith.constant 0 : index
      %c0_29 = arith.constant 0 : index
      %46 = vector.load %arg8[%c0_28, %c0_29] : memref<8x128xf32, #tpu.memory_space<vmem>>, vector<8x128xf32>
      %47 = vector.shape_cast %46 : vector<8x128xf32> to vector<1x8x128xf32>
      %cst_30 = arith.constant dense<0.000000e+00> : vector<1xf32>
      %48 = vector.multi_reduction <add>, %47, %cst_30 [1, 2] : vector<1x8x128xf32> to vector<1xf32>
      %49 = vector.shape_cast %48 : vector<1xf32> to vector<1x1x1xf32>
      %50 = vector.extract %49[0, 0, 0] : f32 from vector<1x1x1xf32>
      %cst_31 = arith.constant 1.000000e+00 : f32
      %51 = arith.maximumf %cst_31, %50 : f32
      %52 = arith.divf %45, %51 : f32
      %c0_32 = arith.constant 0 : index
      %c0_33 = arith.constant 0 : index
      %53 = memref.load %arg6[%c0_32, %c0_33] : memref<1x1xf32, #tpu.memory_space<smem>>
      memref.store %52, %arg6[%c0_32, %c0_33] : memref<1x1xf32, #tpu.memory_space<smem>>
    } else {
    }
    return
  }
  func.func @transform_0(%arg0: i32, %arg1: i32, %arg2: i32) -> (i32, i32, i32) {
    %c1_i32 = arith.constant 1 : i32
    %0 = arith.muli %arg0, %c1_i32 : i32
    %1 = arith.addi %0, %arg2 : i32
    %c0_i32 = arith.constant 0 : i32
    %2 = arith.minsi %1, %c0_i32 : i32
    %c1_i32_0 = arith.constant 1 : i32
    %3 = arith.muli %arg1, %c1_i32_0 : i32
    %c0_i32_1 = arith.constant 0 : i32
    %c0_i32_2 = arith.constant 0 : i32
    return %3, %2, %c0_i32_1 : i32, i32, i32
  }
  func.func @transform_1(%arg0: i32, %arg1: i32, %arg2: i32) -> (i32, i32, i32) {
    %c1_i32 = arith.constant 1 : i32
    %0 = arith.muli %arg0, %c1_i32 : i32
    %1 = arith.addi %0, %arg2 : i32
    %c0_i32 = arith.constant 0 : i32
    %2 = arith.minsi %1, %c0_i32 : i32
    %c2_i32 = arith.constant 2 : i32
    %3 = arith.muli %arg1, %c2_i32 : i32
    %c0_i32_0 = arith.constant 0 : i32
    %c0_i32_1 = arith.constant 0 : i32
    return %3, %2, %c0_i32_0 : i32, i32, i32
  }
  func.func @transform_2(%arg0: i32, %arg1: i32, %arg2: i32) -> (i32, i32, i32) {
    %c1_i32 = arith.constant 1 : i32
    %0 = arith.muli %arg0, %c1_i32 : i32
    %1 = arith.addi %0, %arg2 : i32
    %c0_i32 = arith.constant 0 : i32
    %2 = arith.minsi %1, %c0_i32 : i32
    %c2_i32 = arith.constant 2 : i32
    %3 = arith.muli %arg1, %c2_i32 : i32
    %c1_i32_0 = arith.constant 1 : i32
    %4 = arith.addi %3, %c1_i32_0 : i32
    %c0_i32_1 = arith.constant 0 : i32
    %c0_i32_2 = arith.constant 0 : i32
    return %4, %2, %c0_i32_1 : i32, i32, i32
  }
  func.func @transform_3(%arg0: i32, %arg1: i32, %arg2: i32) -> (i32, i32) {
    %c0_i32 = arith.constant 0 : i32
    %c0_i32_0 = arith.constant 0 : i32
    return %arg0, %c0_i32 : i32, i32
  }
}

</mosaic_0001>

<llo_original>
// kernel: tpu_custom_call.1
$region0: #{tpu_custom_call.1}
  #allocation0 [shape = 'u32[]', space=smem, size = 0x4, offset = 0x4, fixed_abs, tag = 'smem constant byte address 0x4 - core index']
  #allocation1 [shape = 'u32[144,128]{1,0:T(1,128)}', space=vmem, size = 0x12000, scoped, tag = 'internal scratch']
  #allocation2 [shape = 'f32[8,128]{1,0:T(8,128)}', space=vmem, size = 0x1000, scoped, tag = 'scratch operand']
  #allocation3 [shape = 'f32[8,128]{1,0:T(8,128)}', space=vmem, size = 0x1000, scoped, tag = 'scratch operand']
  %s0 = inlined_call_operand.hbm [shape: f32[2,2,128], index: 0, kind: input, shape index: {}]
  %s1 = inlined_call_operand.hbm [shape: f32[4,2,128], index: 1, kind: input, shape index: {}]
  %s2 = inlined_call_operand.hbm [shape: f32[4,2,128], index: 2, kind: input, shape index: {}]
  %s3 = inlined_call_operand.hbm [shape: f32[1,1], index: 3, kind: output, shape index: {}]
  %s4 = sld [smem:[#allocation0]]
  $region65: #{tpu_custom_call.1} parent=0
    _
  %s6 = ssub.s32 1, %s4
  %s7 = scalar_select 0, %s6, %s4
  $region1: #{tpu_custom_call.1} parent=0
    #allocation4 [shape = 'u8[2048]{0}', space=vmem, size = 0x800, scoped, tag = 'input window, operand 0']
    #allocation5 [shape = 's32[2]{0}', space=sflag, size = 0x8, scoped, tag = 'scoped memory for tpu_custom_call.1']
    #allocation6 [shape = 's32[2]{0}', space=sflag, size = 0x8, scoped, tag = 'scoped memory for tpu_custom_call.1']
    #allocation7 [shape = 'u8[2048]{0}', space=vmem, size = 0x800, scoped, tag = 'input window, operand 1']
    #allocation8 [shape = 's32[2]{0}', space=sflag, size = 0x8, scoped, tag = 'scoped memory for tpu_custom_call.1']
    #allocation9 [shape = 'u8[2048]{0}', space=vmem, size = 0x800, scoped, tag = 'input window, operand 2']
    #allocation10 [shape = 'u8[512]{0}', space=smem, size = 0x200, scoped, tag = 'output window, operand 0, single buffered']
    %8 = vsyncpa [#allocation5], 0
    %s9 = scalar_lea.sflag [#allocation5], 1
    %10 = vsyncpa %s9, 0
    %11 = vsyncpa [#allocation8], 0
    %s12 = scalar_lea.sflag [#allocation8], 1
    %13 = vsyncpa %s12, 0
    %14 = vsyncpa [#allocation6], 0
    loop: start=0, step=1, limit=4
    $region2: #{tpu_custom_call.1} parent=1 // loop_pre_header
      _
    $region3: #{tpu_custom_call.1} parent=1 // loop_header
      %s16 = sphi 0, %s20
      %p17 = scmp.ge.s32.totalorder %s16, 4
      %s23 = sphi 0, %s42
      %s24 = sphi 0, %s38
      %s25 = sphi 0, %s34
      %s26 = sphi 0, %s23
      %s27 = sphi 0, %s24
      %s28 = sphi 0, %s25
      %s29 = sphi 0, %s26
      %s30 = sphi 0, %s27
      %s31 = sphi 0, %s28
      %s53 = sphi 0, %s55
      %s56 = sphi 0, %s53
      %s57 = sphi 0, %s56
      %s73 = sphi 0, %s57
      %s89 = sphi 0, %s91
      %s92 = sphi 0, %s89
      %s93 = sphi 0, %s92
      %s109 = sphi 0, %s93
      %s127 = sphi 0, %s129
      %s130 = sphi 0, %s127
      %s131 = sphi 0, %s130
      %s147 = sphi 0, %s131
      %s153 = sphi 0, %s155
      %s156 = sphi 0, %s153
      %s157 = sphi 0, %s156
      %s173 = sphi 0, %s157
    $region4: #{tpu_custom_call.1} parent=1 // loop_header_branch
      %19 = sbr.rel (%p17) target = $region8
    $region5: #{tpu_custom_call.1} parent=1 // loop_body
      %s21 = ssub.s32 %s16, 1
      %s22 = ssub.s32 %s16, 2
      %s32 = sadd.s32 1, %s25
      %p33 = scmp.ge.s32.totalorder %s32, 1
      %s34 = scalar_select %p33, 0, %s32
      %s35 = sadd.s32 1, %s24
      %s36 = scalar_select %p33, %s35, %s24
      %p37 = scmp.ge.s32.totalorder %s36, 2
      %s38 = scalar_select %p37, 0, %s36
      %s39 = sadd.s32 1, %s23
      %s40 = scalar_select %p37, %s39, %s23
      %p41 = scmp.ge.s32.totalorder %s40, 1
      %s42 = scalar_select %p41, 0, %s40
      %s43 = sadd.s32 %s23, %s25
      %p44 = scmp.lt.s32.totalorder %s43, 0
      %s45 = scalar_select %p44, %s43, 0
      %s46 = sadd.s32 %s42, %s34
      %p47 = scmp.lt.s32.totalorder %s46, 0
      %s48 = scalar_select %p47, %s46, 0
      %s49 = ssub.s32 %s24, %s38
      %s50 = ssub.s32 %s45, %s48
      %s51 = sor.u32 %s49, %s50
      %p52 = scmp.eq.s32.totalorder %s51, 0
      %s54 = sadd.s32 %s53, 1
      %s55 = scalar_select %p52, %s53, %s54
      %p58 = pneg %p52
      %p59 = scmp.eq.s32.totalorder %s16, 1
      %p60 = por %p58, %p59
      %p61 = scmp.ne.s32.totalorder %s53, %s56
      %p62 = scmp.eq.s32.totalorder %s16, 0
      %p63 = por %p61, %p62
      %p64 = scmp.ne.s32.totalorder %s53, %s56
      %p65 = scmp.eq.s32.totalorder %s21, 1
      %p66 = por %p64, %p65
      %p67 = scmp.ne.s32.totalorder %s56, %s57
      %p68 = scmp.eq.s32.totalorder %s21, 0
      %p69 = por %p67, %p68
      %p70 = scmp.ne.s32.totalorder %s56, %s57
      %p71 = scmp.eq.s32.totalorder %s22, 1
      %p72 = por %p70, %p71
      %p74 = scmp.ne.s32.totalorder %s57, %s73
      %p75 = scmp.eq.s32.totalorder %s22, 0
      %p76 = por %p74, %p75
      %s77 = sadd.s32 %s23, %s25
      %p78 = scmp.lt.s32.totalorder %s77, 0
      %s79 = scalar_select %p78, %s77, 0
      %s80 = smul.u32 %s24, 2
      %s81 = sadd.s32 %s42, %s34
      %p82 = scmp.lt.s32.totalorder %s81, 0
      %s83 = scalar_select %p82, %s81, 0
      %s84 = smul.u32 %s38, 2
      %s85 = ssub.s32 %s80, %s84
      %s86 = ssub.s32 %s79, %s83
      %s87 = sor.u32 %s85, %s86
      %p88 = scmp.eq.s32.totalorder %s87, 0
      %s90 = sadd.s32 %s89, 1
      %s91 = scalar_select %p88, %s89, %s90
      %p94 = pneg %p88
      %p95 = scmp.eq.s32.totalorder %s16, 1
      %p96 = por %p94, %p95
      %p97 = scmp.ne.s32.totalorder %s89, %s92
      %p98 = scmp.eq.s32.totalorder %s16, 0
      %p99 = por %p97, %p98
      %p100 = scmp.ne.s32.totalorder %s89, %s92
      %p101 = scmp.eq.s32.totalorder %s21, 1
      %p102 = por %p100, %p101
      %p103 = scmp.ne.s32.totalorder %s92, %s93
      %p104 = scmp.eq.s32.totalorder %s21, 0
      %p105 = por %p103, %p104
      %p106 = scmp.ne.s32.totalorder %s92, %s93
      %p107 = scmp.eq.s32.totalorder %s22, 1
      %p108 = por %p106, %p107
      %p110 = scmp.ne.s32.totalorder %s93, %s109
      %p111 = scmp.eq.s32.totalorder %s22, 0
      %p112 = por %p110, %p111
      %s113 = sadd.s32 %s23, %s25
      %p114 = scmp.lt.s32.totalorder %s113, 0
      %s115 = scalar_select %p114, %s113, 0
      %s116 = smul.u32 %s24, 2
      %s117 = sadd.s32 %s116, 1
      %s118 = sadd.s32 %s42, %s34
      %p119 = scmp.lt.s32.totalorder %s118, 0
      %s120 = scalar_select %p119, %s118, 0
      %s121 = smul.u32 %s38, 2
      %s122 = sadd.s32 %s121, 1
      %s123 = ssub.s32 %s117, %s122
      %s124 = ssub.s32 %s115, %s120
      %s125 = sor.u32 %s123, %s124
      %p126 = scmp.eq.s32.totalorder %s125, 0
      %s128 = sadd.s32 %s127, 1
      %s129 = scalar_select %p126, %s127, %s128
      %p132 = pneg %p126
      %p133 = scmp.eq.s32.totalorder %s16, 1
      %p134 = por %p132, %p133
      %p135 = scmp.ne.s32.totalorder %s127, %s130
      %p136 = scmp.eq.s32.totalorder %s16, 0
      %p137 = por %p135, %p136
      %p138 = scmp.ne.s32.totalorder %s127, %s130
      %p139 = scmp.eq.s32.totalorder %s21, 1
      %p140 = por %p138, %p139
      %p141 = scmp.ne.s32.totalorder %s130, %s131
      %p142 = scmp.eq.s32.totalorder %s21, 0
      %p143 = por %p141, %p142
      %p144 = scmp.ne.s32.totalorder %s130, %s131
      %p145 = scmp.eq.s32.totalorder %s22, 1
      %p146 = por %p144, %p145
      %p148 = scmp.ne.s32.totalorder %s131, %s147
      %p149 = scmp.eq.s32.totalorder %s22, 0
      %p150 = por %p148, %p149
      %s151 = ssub.s32 %s23, %s42
      %p152 = scmp.eq.s32.totalorder %s151, 0
      %s154 = sadd.s32 %s153, 1
      %s155 = scalar_select %p152, %s153, %s154
      %p158 = pneg %p152
      %p159 = scmp.eq.s32.totalorder %s16, 1
      %p160 = por %p158, %p159
      %p161 = scmp.ne.s32.totalorder %s153, %s156
      %p162 = scmp.eq.s32.totalorder %s16, 0
      %p163 = por %p161, %p162
      %p164 = scmp.ne.s32.totalorder %s153, %s156
      %p165 = scmp.eq.s32.totalorder %s21, 1
      %p166 = por %p164, %p165
      %p167 = scmp.ne.s32.totalorder %s156, %s157
      %p168 = scmp.eq.s32.totalorder %s21, 0
      %p169 = por %p167, %p168
      %p170 = scmp.ne.s32.totalorder %s156, %s157
      %p171 = scmp.eq.s32.totalorder %s22, 1
      %p172 = por %p170, %p171
      %p174 = scmp.ne.s32.totalorder %s157, %s173
      %p175 = scmp.eq.s32.totalorder %s22, 0
      %p176 = por %p174, %p175
      %p177 = scmp.le.s32.totalorder 1, %s16
      %p178 = scmp.lt.s32.totalorder %s16, 3
      %p179 = pnand %p177, %p178
      %p180 = pneg %p179
      // Predicated region
      $region9: #{tpu_custom_call.1} parent=5 // pred_check
        _
      $region10: #{tpu_custom_call.1} parent=5 // pred_check_branch
        %182 = sbr.rel (%p179) target = $region12
      $region11: #{tpu_custom_call.1} parent=5 // pred_region
        %s183 = ssub.s32 %s16, 1
      $region12: #{tpu_custom_call.1} parent=5 // pred_fallthru
        _
      %p184 = scmp.lt.s32.totalorder %s16, 2
      // Predicated region
      $region13: #{tpu_custom_call.1} parent=5 // pred_check
        %p185 = pneg %p184
      $region14: #{tpu_custom_call.1} parent=5 // pred_check_branch
        %187 = sbr.rel (%p185) target = $region16
      $region15: #{tpu_custom_call.1} parent=5 // pred_region
        // Predicated region
        $region17: #{tpu_custom_call.1} parent=15 // pred_check
          %p188 = pneg %p63
        $region18: #{tpu_custom_call.1} parent=15 // pred_check_branch
          %190 = sbr.rel (%p188) target = $region20
        $region19: #{tpu_custom_call.1} parent=15 // pred_region
          %s191 = sand.u32 %s53, 1
          %s192 = scalar_lea.sflag [#allocation5], %s191
          %s193 = sand.u32 %s53, 1
          %s194 = smul.addr %s193, 2
          %s195 = scalar_lea.vmem [#allocation4], %s194
          %s196 = sadd.s32 %s23, %s25
          %p197 = scmp.lt.s32.totalorder %s196, 0
          %s198 = scalar_select %p197, %s196, 0
          %s200 = ssub.s32 32, 32
          %201 = vsyncadd %s192, %s200
          %s202 = sadd.s32 %s198, %s24
          %s203 = smul.addr %s202, 32
          %s204 = scalar_lea.hbm %s0, %s203
          %s206 = sshll.u32 %s195, 4
          %s207 = int_to_ptr.vmem [resolvable:$true] %s206
          %209 = dma.hbm_to_vmem [thread:$0]  %s204, 32, %s207, %s192
        $region20: #{tpu_custom_call.1} parent=15 // pred_fallthru
          _
        // Predicated region
        $region21: #{tpu_custom_call.1} parent=15 // pred_check
          %p210 = pneg %p99
        $region22: #{tpu_custom_call.1} parent=15 // pred_check_branch
          %212 = sbr.rel (%p210) target = $region24
        $region23: #{tpu_custom_call.1} parent=15 // pred_region
          %s213 = sand.u32 %s16, 1
          %s214 = scalar_lea.sflag [#allocation8], %s213
          %s215 = sand.u32 %s89, 1
          %s216 = smul.addr %s215, 2
          %s217 = scalar_lea.vmem [#allocation7], %s216
          %s218 = sadd.s32 %s23, %s25
          %p219 = scmp.lt.s32.totalorder %s218, 0
          %s220 = scalar_select %p219, %s218, 0
          %s221 = smul.u32 %s24, 2
          %s223 = ssub.s32 32, 32
          %224 = vsyncadd %s214, %s223
          %s225 = sadd.s32 %s220, %s221
          %s226 = smul.addr %s225, 32
          %s227 = scalar_lea.hbm %s1, %s226
          %s229 = sshll.u32 %s217, 4
          %s230 = int_to_ptr.vmem [resolvable:$true] %s229
          %232 = dma.hbm_to_vmem [thread:$0]  %s227, 32, %s230, %s214
        $region24: #{tpu_custom_call.1} parent=15 // pred_fallthru
          _
        // Predicated region
        $region25: #{tpu_custom_call.1} parent=15 // pred_check
          %p233 = pneg %p137
        $region26: #{tpu_custom_call.1} parent=15 // pred_check_branch
          %235 = sbr.rel (%p233) target = $region28
        $region27: #{tpu_custom_call.1} parent=15 // pred_region
          %s236 = sand.u32 %s16, 1
          %s237 = scalar_lea.sflag [#allocation8], %s236
          %s238 = sand.u32 %s127, 1
          %s239 = smul.addr %s238, 2
          %s240 = scalar_lea.vmem [#allocation9], %s239
          %s241 = sadd.s32 %s23, %s25
          %p242 = scmp.lt.s32.totalorder %s241, 0
          %s243 = scalar_select %p242, %s241, 0
          %s244 = smul.u32 %s24, 2
          %s245 = sadd.s32 %s244, 1
          %s247 = ssub.s32 32, 32
          %248 = vsyncadd %s237, %s247
          %s249 = sadd.s32 %s243, %s245
          %s250 = smul.addr %s249, 32
          %s251 = scalar_lea.hbm %s2, %s250
          %s253 = sshll.u32 %s240, 4
          %s254 = int_to_ptr.vmem [resolvable:$true] %s253
          %256 = dma.hbm_to_vmem [thread:$0]  %s251, 32, %s254, %s237
        $region28: #{tpu_custom_call.1} parent=15 // pred_fallthru
          _
      $region16: #{tpu_custom_call.1} parent=5 // pred_fallthru
        _
      %p257 = scmp.le.s32.totalorder 1, %s16
      %p258 = scmp.lt.s32.totalorder %s16, 3
      %p259 = pnand %p257, %p258
      %p260 = pneg %p259
      // Predicated region
      $region29: #{tpu_custom_call.1} parent=5 // pred_check
        _
      $region30: #{tpu_custom_call.1} parent=5 // pred_check_branch
        %262 = sbr.rel (%p259) target = $region32
      $region31: #{tpu_custom_call.1} parent=5 // pred_region
        %s263 = ssub.s32 %s16, 1
        %s264 = sand.u32 %s56, 1
        %s265 = scalar_lea.sflag [#allocation5], %s264
        %s266 = sand.u32 %s56, 1
        %s267 = smul.addr %s266, 2
        %s268 = scalar_lea.vmem [#allocation4], %s267
        // Predicated region
        $region33: #{tpu_custom_call.1} parent=31 // pred_check
          %p269 = pneg %p69
        $region34: #{tpu_custom_call.1} parent=31 // pred_check_branch
          %271 = sbr.rel (%p269) target = $region36
        $region35: #{tpu_custom_call.1} parent=31 // pred_region
          %272 = dma.done %s265, 32
        $region36: #{tpu_custom_call.1} parent=31 // pred_fallthru
          _
        %s273 = sand.u32 %s21, 1
        %s274 = scalar_lea.sflag [#allocation8], %s273
        %s275 = sand.u32 %s92, 1
        %s276 = smul.addr %s275, 2
        %s277 = scalar_lea.vmem [#allocation7], %s276
        // Predicated region
        $region37: #{tpu_custom_call.1} parent=31 // pred_check
          %p278 = pneg %p105
        $region38: #{tpu_custom_call.1} parent=31 // pred_check_branch
          %280 = sbr.rel (%p278) target = $region40
        $region39: #{tpu_custom_call.1} parent=31 // pred_region
          %281 = dma.done %s274, 32
        $region40: #{tpu_custom_call.1} parent=31 // pred_fallthru
          _
        %s282 = sand.u32 %s21, 1
        %s283 = scalar_lea.sflag [#allocation8], %s282
        %s284 = sand.u32 %s130, 1
        %s285 = smul.addr %s284, 2
        %s286 = scalar_lea.vmem [#allocation9], %s285
        // Predicated region
        $region41: #{tpu_custom_call.1} parent=31 // pred_check
          %p287 = pneg %p143
        $region42: #{tpu_custom_call.1} parent=31 // pred_check_branch
          %289 = sbr.rel (%p287) target = $region44
        $region43: #{tpu_custom_call.1} parent=31 // pred_region
          %290 = dma.done %s283, 32
        $region44: #{tpu_custom_call.1} parent=31 // pred_fallthru
          _
        %s291 = sand.u32 %s56, 1
        %s292 = scalar_lea.sflag [#allocation5], %s291
        %s293 = sand.u32 %s56, 1
        %s294 = smul.addr %s293, 2
        %s295 = scalar_lea.vmem [#allocation4], %s294
        %p296 = pneg %p69
        %p297 = pneg %p66
        %s298 = sand.u32 %s21, 1
        %s299 = scalar_lea.sflag [#allocation8], %s298
        %s300 = sand.u32 %s92, 1
        %s301 = smul.addr %s300, 2
        %s302 = scalar_lea.vmem [#allocation7], %s301
        %p303 = pneg %p105
        %p304 = pneg %p102
        %s305 = sand.u32 %s21, 1
        %s306 = scalar_lea.sflag [#allocation8], %s305
        %s307 = sand.u32 %s130, 1
        %s308 = smul.addr %s307, 2
        %s309 = scalar_lea.vmem [#allocation9], %s308
        %p310 = pneg %p143
        %p311 = pneg %p140
        %p312 = pneg %p169
        %p313 = pneg %p166
        %s314 = sadd.s32 %s26, %s28
        %p315 = scmp.lt.s32.totalorder %s314, 0
        %s316 = scalar_select %p315, %s314, 0
        %s317 = sadd.s32 %s26, %s28
        %p318 = scmp.lt.s32.totalorder %s317, 0
        %s319 = scalar_select %p318, %s317, 0
        %s320 = smul.u32 %s27, 2
        %s321 = sadd.s32 %s26, %s28
        %p322 = scmp.lt.s32.totalorder %s321, 0
        %s323 = scalar_select %p322, %s321, 0
        %s324 = smul.u32 %s27, 2
        %s325 = sadd.s32 %s324, 1
        %p326 = scmp.eq.s32.totalorder %s27, 0
        %p327 = scmp.eq.s32.totalorder %s28, 0
        %p328 = pnand %p326, %p327
        %p329 = pneg %p328
        // Predicated region
        $region45: #{tpu_custom_call.1} parent=31 // pred_check
          _
        $region46: #{tpu_custom_call.1} parent=31 // pred_check_branch
          %331 = sbr.rel (%p328) target = $region48
        $region47: #{tpu_custom_call.1} parent=31 // pred_region
          %332 = vst [vmem:[#allocation2] sm:$0xff] 0.0
          %333 = vst [vmem:[#allocation3] sm:$0xff] 0.0
        $region48: #{tpu_custom_call.1} parent=31 // pred_fallthru
          _
        %v334 = vld [vmem:[%s268] sm:$0x3]
        %v335 = vld [vmem:[%s277] sm:$0x3]
        %v336 = vld [vmem:[%s286] sm:$0x3]
        %v337 = vadd.f32 %v335, 1e-10
        %v338 = vrcp.pop %v337
        %v339 = vsub.f32 %v334, %v335
        %v340 = vand.u32 2147483647, %v339
        %v341 = vmul.f32 %v340, %v338
        %vm342 = vcmp.lt.f32.partialorder %v341, 1.0
        %v343 = vmul.f32 %v341, 0.5
        %v344 = vmul.f32 %v343, %v341
        %v345 = vsub.f32 %v341, 0.5
        %v346 = vsel %vm342, %v344, %v345
        %v347 = vmul.f32 %v336, %v346
        %v348 = vld [vmem:[#allocation2] sm:$0x1]
        %vm349 = vcmask 1041408
        %v350 = vsel %vm349, %v347, 0.0
        %v351 = vrot.slane %v350, 4
        %v352 = vadd.f32 %v350, %v351
        %v353 = vrot.slane %v352, 2
        %v354 = vadd.f32 %v352, %v353
        %v355 = vrot.slane %v354, 1
        %v356 = vadd.f32 %v354, %v355
        %v357 = vadd.f32 %v348, %v356
        %358 = vst [vmem:[#allocation2] sm:$0x1] %v357
        %v359 = vld [vmem:[#allocation3] sm:$0x1]
        %v360 = vsel %vm349, %v336, 0.0
        %v361 = vrot.slane %v360, 4
        %v362 = vadd.f32 %v360, %v361
        %v363 = vrot.slane %v362, 2
        %v364 = vadd.f32 %v362, %v363
        %v365 = vrot.slane %v364, 1
        %v366 = vadd.f32 %v364, %v365
        %v367 = vadd.f32 %v359, %v366
        %368 = vst [vmem:[#allocation3] sm:$0x1] %v367
        %p369 = scmp.eq.s32.totalorder %s27, 1
        %p370 = pnand %p369, %p327
        %p371 = pneg %p370
        // Predicated region
        $region49: #{tpu_custom_call.1} parent=31 // pred_check
          _
        $region50: #{tpu_custom_call.1} parent=31 // pred_check_branch
          %373 = sbr.rel (%p370) target = $region52
        $region51: #{tpu_custom_call.1} parent=31 // pred_region
          %v374 = vld [vmem:[#allocation2] sm:$0xff]
          %375 = vadd.xlane.f32.xlu0 %v374
          %v376 = vpop.xlane.xlu0 %375
          %v377 = vrot.slane %v376, 4
          %v378 = vadd.f32 %v376, %v377
          %v379 = vrot.slane %v378, 2
          %v380 = vadd.f32 %v378, %v379
          %v381 = vrot.slane %v380, 1
          %v382 = vadd.f32 %v380, %v381
          %s383 = vtos %v382
          %v384 = vld [vmem:[#allocation3] sm:$0xff]
          %385 = vadd.xlane.f32.xlu0 %v384
          %v386 = vpop.xlane.xlu0 %385
          %v387 = vrot.slane %v386, 4
          %v388 = vadd.f32 %v386, %v387
          %v389 = vrot.slane %v388, 2
          %v390 = vadd.f32 %v388, %v389
          %v391 = vrot.slane %v390, 1
          %v392 = vadd.f32 %v390, %v391
          %s393 = vtos %v392
          %s394 = smax.f32 %s393, 1.0
          %v395 = vstv %s394
          %v396 = vrcp.pop %v395
          %s397 = vtos %v396
          %s398 = smul.f32 %s383, %s397
          %s399 = scalar_lea.smem [#allocation10], 0
          %400 = sst [smem:[%s399]] %s398
        $region52: #{tpu_custom_call.1} parent=31 // pred_fallthru
          _
        // Predicated region
        $region53: #{tpu_custom_call.1} parent=31 // pred_check
          %p401 = pneg %p166
        $region54: #{tpu_custom_call.1} parent=31 // pred_check_branch
          %403 = sbr.rel (%p401) target = $region56
        $region55: #{tpu_custom_call.1} parent=31 // pred_region
          %s405 = ssub.s32 16, 16
          %406 = vsyncadd [#allocation6], %s405
          %s407 = smul.addr %s26, 16
          %s408 = scalar_lea.hbm %s3, %s407
          %411 = dma.smem_to_hbm [#allocation10], 16, %s408, [#allocation6]
        $region56: #{tpu_custom_call.1} parent=31 // pred_fallthru
          _
        // Predicated region
        $region57: #{tpu_custom_call.1} parent=31 // pred_check
          %p412 = pneg %p166
        $region58: #{tpu_custom_call.1} parent=31 // pred_check_branch
          %414 = sbr.rel (%p412) target = $region60
        $region59: #{tpu_custom_call.1} parent=31 // pred_region
          %415 = dma.done [#allocation6], 16
        $region60: #{tpu_custom_call.1} parent=31 // pred_fallthru
          _
        %416 = sfence
      $region32: #{tpu_custom_call.1} parent=5 // pred_fallthru
        _
      %p417 = scmp.le.s32.totalorder 2, %s16
      // Predicated region
      $region61: #{tpu_custom_call.1} parent=5 // pred_check
        %p418 = pneg %p417
      $region62: #{tpu_custom_call.1} parent=5 // pred_check_branch
        %420 = sbr.rel (%p418) target = $region64
      $region63: #{tpu_custom_call.1} parent=5 // pred_region
        %s421 = ssub.s32 %s16, 2
      $region64: #{tpu_custom_call.1} parent=5 // pred_fallthru
        _
    $region6: #{tpu_custom_call.1} parent=1 // loop_footer
      %s20 = sadd.s32 1, %s16
    $region7: #{tpu_custom_call.1} parent=1 // loop_footer_branch
      %15 = sbr.rel target = $region3
    $region8: #{tpu_custom_call.1} parent=1 // loop_exit
      _
    %422 = vsyncpa [#allocation5], 1
    %s423 = scalar_lea.sflag [#allocation5], 1
    %424 = vsyncpa %s423, 1
    %425 = vsyncpa [#allocation8], 1
    %s426 = scalar_lea.sflag [#allocation8], 1
    %427 = vsyncpa %s426, 1
    %428 = vsyncpa [#allocation6], 1
    %s429 = scalar_lea.sflag [#allocation6], 1
    %430 = vsyncpa %s429, 1

</llo_original>
